<compile_context>
chip_gen: v7x
topology: tpu7x:2x2x1
jax: 0.10.0
libtpu: 0.0.40
codegen_flags: <defaults>
</compile_context>

<pallas_src>
import functools
import math

import jax
import jax.numpy as jnp
from jax.experimental import pallas as pl
from jax.experimental.pallas import tpu as pltpu


def _pick_tile(dim, target, unit):
    """Largest tile <= target that divides `dim` (multiple of `unit`), or the
    full dim (always a legal block)."""
    if dim <= target:
        return dim
    t = (target // unit) * unit
    while t >= unit:
        if dim % t == 0:
            return t
        t -= unit
    return dim


def _vmem_limit(nbytes):
    # Scoped-VMEM budget: computed usage + 50% headroom, clamped to
    # [32 MiB, 64 MiB] (>= v5e's 16 MiB default, <= v7x physical).
    return int(min(64 * 1024 * 1024, max(32 * 1024 * 1024, nbytes * 3 // 2)))


# ----------------------------------------------------------------------------
# Kernel 1: fused residual-add + LayerNorm (dropout -> add -> LN, dropout is
# identity at p=0 / eval).  Tiled over rows; LN stats in f32; emits normalized
# activations (in the compute dtype) and the updated residual.
# ----------------------------------------------------------------------------
def _add_ln_kernel(x_ref, res_ref, w_ref, b_ref, y_ref, newres_ref, *, eps):
    res = x_ref[...].astype(jnp.float32) + res_ref[...].astype(jnp.float32)
    newres_ref[...] = res.astype(newres_ref.dtype)
    mu = jnp.mean(res, axis=-1, keepdims=True)
    xc = res - mu
    var = jnp.mean(xc * xc, axis=-1, keepdims=True)
    inv = jax.lax.rsqrt(var + eps)
    y = xc * inv * w_ref[...].astype(jnp.float32) + b_ref[...].astype(jnp.float32)
    y_ref[...] = y.astype(y_ref.dtype)


def add_layernorm(x, res, w, b, eps=1e-5, out_dtype=None):
    n, d = x.shape
    out_dtype = jnp.dtype(x.dtype) if out_dtype is None else jnp.dtype(out_dtype)
    # Cap the row tile (VMEM budget) and keep >=2 grid steps for v7x megacore.
    target = max(8, min(512, n // 2)) if n >= 16 else n
    tm = _pick_tile(n, target, 8)

    blk_bytes = 2 * tm * d * (x.dtype.itemsize + 2 * res.dtype.itemsize
                              + out_dtype.itemsize) + 4 * d * 4
    kernel = functools.partial(_add_ln_kernel, eps=eps)
    return pl.pallas_call(
        kernel,
        grid=(n // tm,),
        in_specs=[
            pl.BlockSpec((tm, d), lambda i: (i, 0)),
            pl.BlockSpec((tm, d), lambda i: (i, 0)),
            pl.BlockSpec((1, d), lambda i: (0, 0)),   # gamma (constant block)
            pl.BlockSpec((1, d), lambda i: (0, 0)),   # beta
        ],
        out_specs=(
            pl.BlockSpec((tm, d), lambda i: (i, 0)),
            pl.BlockSpec((tm, d), lambda i: (i, 0)),
        ),
        out_shape=(
            jax.ShapeDtypeStruct((n, d), out_dtype),    # normalized activations
            jax.ShapeDtypeStruct((n, d), res.dtype),    # updated residual
        ),
        compiler_params=pltpu.CompilerParams(
            dimension_semantics=("parallel",),
            vmem_limit_bytes=_vmem_limit(blk_bytes)),
        cost_estimate=pl.CostEstimate(
            flops=int(10 * n * d),
            transcendentals=int(n),
            bytes_accessed=int(n * d * (x.dtype.itemsize + 2 * res.dtype.itemsize
                                        + out_dtype.itemsize)),
        ),
    )(x, res, w.reshape(1, d), b.reshape(1, d))


# ----------------------------------------------------------------------------
# Kernel 2: tiled Linear (x @ W + b) with optional exact-erf GELU epilogue.
# Grid = (M//tm, N//tn, K//tk); f32 accumulator in VMEM scratch; K is last.
# ----------------------------------------------------------------------------
def _linear_kernel(x_ref, w_ref, b_ref, o_ref, acc_ref, *, activation):
    @pl.when(pl.program_id(2) == 0)
    def _init():
        acc_ref[...] = jnp.zeros(acc_ref.shape, acc_ref.dtype)

    acc_ref[...] += jnp.dot(x_ref[...], w_ref[...],
                            preferred_element_type=jnp.float32)

    @pl.when(pl.program_id(2) == pl.num_programs(2) - 1)
    def _finalize():
        y = acc_ref[...] + b_ref[...].astype(jnp.float32)
        if activation == "gelu":
            y = jax.nn.gelu(y, approximate=False)   # exact erf, matches nn.GELU
        o_ref[...] = y.astype(o_ref.dtype)


def linear(x, w, b, activation=None):
    m, k = x.shape
    _, n = w.shape
    tk_target = 1024 if x.dtype == jnp.bfloat16 else 512
    tm = _pick_tile(m, 512, 8)
    tn = _pick_tile(n, 512, 128)
    tk = _pick_tile(k, tk_target, 128)

    blk_bytes = (2 * (tm * tk * x.dtype.itemsize + tk * tn * w.dtype.itemsize
                      + tn * 4 + tm * tn * x.dtype.itemsize)
                 + tm * tn * 4)
    kernel = functools.partial(_linear_kernel, activation=activation)
    return pl.pallas_call(
        kernel,
        out_shape=jax.ShapeDtypeStruct((m, n), x.dtype),
        grid_spec=pltpu.PrefetchScalarGridSpec(
            num_scalar_prefetch=0,
            grid=(m // tm, n // tn, k // tk),
            in_specs=[
                pl.BlockSpec((tm, tk), lambda i, j, kk: (i, kk)),
                pl.BlockSpec((tk, tn), lambda i, j, kk: (kk, j)),
                pl.BlockSpec((1, tn), lambda i, j, kk: (0, j)),
            ],
            out_specs=pl.BlockSpec((tm, tn), lambda i, j, kk: (i, j)),
            scratch_shapes=[pltpu.VMEM((tm, tn), jnp.float32)],
        ),
        compiler_params=pltpu.CompilerParams(
            dimension_semantics=("parallel", "parallel", "arbitrary"),
            vmem_limit_bytes=_vmem_limit(blk_bytes)),
        cost_estimate=pl.CostEstimate(
            flops=int(2 * m * n * k),
            transcendentals=int(m * n if activation == "gelu" else 0),
            bytes_accessed=int(x.size * x.dtype.itemsize
                               + w.size * w.dtype.itemsize
                               + 2 * m * n * x.dtype.itemsize),
        ),
    )(x, w, b.reshape(1, n).astype(jnp.float32))


# ----------------------------------------------------------------------------
# Kernel 3: flash-style multi-head self-attention with online softmax.
# One grid step handles `hg` heads (hg*Hd = lane-dense block width); the
# 1/sqrt(Hd) scale is pre-folded into Wqkv, so no per-step q scaling.
# Grid = (B, H//hg, S//tq, S//tkv); running max / sum / acc in f32 VMEM.
# ----------------------------------------------------------------------------
def _flash_attn_kernel(q_ref, k_ref, v_ref, o_ref, m_sc, l_sc, acc_sc, *, hg, hd):
    ki = pl.program_id(3)

    @pl.when(ki == 0)
    def _init():
        m_sc[...] = jnp.full(m_sc.shape, -jnp.inf, m_sc.dtype)
        l_sc[...] = jnp.zeros(l_sc.shape, l_sc.dtype)
        acc_sc[...] = jnp.zeros(acc_sc.shape, acc_sc.dtype)

    for h in range(hg):                               # static unroll (hg is 1 or 2)
        sl = slice(h * hd, (h + 1) * hd)
        s = jax.lax.dot_general(                      # q @ k^T on the MXU
            q_ref[:, sl], k_ref[:, sl], (((1,), (1,)), ((), ())),
            preferred_element_type=jnp.float32)       # (tq, tkv) f32

        m_prev = m_sc[:, h:h + 1]
        m_new = jnp.maximum(m_prev, jnp.max(s, axis=-1, keepdims=True))
        alpha = jnp.exp(m_prev - m_new)
        p = jnp.exp(s - m_new)
        l_sc[:, h:h + 1] = alpha * l_sc[:, h:h + 1] + jnp.sum(p, axis=-1,
                                                              keepdims=True)
        acc_sc[:, sl] = alpha * acc_sc[:, sl] + jnp.dot(
            p.astype(v_ref.dtype), v_ref[:, sl], preferred_element_type=jnp.float32)
        m_sc[:, h:h + 1] = m_new

    @pl.when(ki == pl.num_programs(3) - 1)
    def _finalize():
        for h in range(hg):
            sl = slice(h * hd, (h + 1) * hd)
            o_ref[:, sl] = (acc_sc[:, sl] *
                            pl.reciprocal(l_sc[:, h:h + 1],
                                          approx=True)).astype(o_ref.dtype)


def multihead_attention(qkv, B, S, H, Hd):
    """Self-attention reading head slices straight out of the (B*S, 3*D) qkv
    slab and writing a lane-dense (B*S, D) output slab.  Heads are grouped so
    the column block width is 128 lanes when Hd divides 128."""
    D = H * Hd
    dtype = qkv.dtype
    assert S % 8 == 0, "sequence length must be a multiple of 8"
    tq = _pick_tile(S, 512, 8)
    tkv = _pick_tile(S, 1024, 128)      # lane dim of the score tiles: 128-aligned
    nq, nkv = S // tq, S // tkv
    cost = pl.CostEstimate(
        flops=int(4 * B * H * S * S * Hd),
        transcendentals=int(B * H * S * S),
        bytes_accessed=int(qkv.size * dtype.itemsize + B * S * D * dtype.itemsize),
    )

    direct = False
    if Hd % 128 == 0:
        hg, bw = 1, Hd
        direct = True
    elif 128 % Hd == 0 and H % (128 // Hd) == 0 and D % 128 == 0:
        hg, bw = 128 // Hd, 128          # e.g. Hd=64 -> 2 heads per grid step
        direct = True

    if direct:
        ngrp = H // hg
        koff = D // bw                   # column-block offset of the k section
        grid = (B, ngrp, nq, nkv)
        scratch = [
            pltpu.VMEM((tq, hg), jnp.float32),   # running max (per head in group)
            pltpu.VMEM((tq, hg), jnp.float32),   # running sum
            pltpu.VMEM((tq, bw), jnp.float32),   # output accumulator
        ]
        blk_bytes = (2 * (2 * tq * bw + 2 * tkv * bw) * dtype.itemsize
                     + (2 * tq * hg + tq * bw) * 4)
        kernel = functools.partial(_flash_attn_kernel, hg=hg, hd=Hd)
        in_specs = [
            pl.BlockSpec((tq, bw), lambda b, g, qi, ki: (b * nq + qi, g)),
            pl.BlockSpec((tkv, bw), lambda b, g, qi, ki: (b * nkv + ki, koff + g)),
            pl.BlockSpec((tkv, bw), lambda b, g, qi, ki: (b * nkv + ki, 2 * koff + g)),
        ]
        out_spec = pl.BlockSpec((tq, bw), lambda b, g, qi, ki: (b * nq + qi, g))
        return pl.pallas_call(
            kernel,
            out_shape=jax.ShapeDtypeStruct((B * S, D), dtype),
            grid_spec=pltpu.PrefetchScalarGridSpec(
                num_scalar_prefetch=0, grid=grid,
                in_specs=in_specs, out_specs=out_spec, scratch_shapes=scratch),
            compiler_params=pltpu.CompilerParams(
                dimension_semantics=("parallel", "parallel", "parallel", "arbitrary"),
                vmem_limit_bytes=_vmem_limit(blk_bytes)),
            cost_estimate=cost,
        )(qkv, qkv, qkv)

    # TODO(synk): rare head_dims that neither are a multiple of 128 nor divide
    # 128 fall back to a per-head layout via one JAX transpose.
    qkv_t = qkv.reshape(B, S, 3, H, Hd).transpose(2, 0, 3, 1, 4)
    qkv_t = qkv_t.reshape(3, B * H * S, Hd)
    q2d, k2d, v2d = qkv_t[0], qkv_t[1], qkv_t[2]
    kernel = functools.partial(_flash_attn_kernel, hg=1, hd=Hd)
    scratch = [pltpu.VMEM((tq, 1), jnp.float32),
               pltpu.VMEM((tq, 1), jnp.float32),
               pltpu.VMEM((tq, Hd), jnp.float32)]
    out = pl.pallas_call(
        kernel,
        out_shape=jax.ShapeDtypeStruct((B * H * S, Hd), dtype),
        grid_spec=pltpu.PrefetchScalarGridSpec(
            num_scalar_prefetch=0, grid=(B, H, nq, nkv),
            in_specs=[
                pl.BlockSpec((tq, Hd), lambda b, h, qi, ki: ((b * H + h) * nq + qi, 0)),
                pl.BlockSpec((tkv, Hd), lambda b, h, qi, ki: ((b * H + h) * nkv + ki, 0)),
                pl.BlockSpec((tkv, Hd), lambda b, h, qi, ki: ((b * H + h) * nkv + ki, 0)),
            ],
            out_specs=pl.BlockSpec((tq, Hd),
                                   lambda b, h, qi, ki: ((b * H + h) * nq + qi, 0)),
            scratch_shapes=scratch),
        compiler_params=pltpu.CompilerParams(
            dimension_semantics=("parallel", "parallel", "parallel", "arbitrary")),
        cost_estimate=cost,
    )(q2d, k2d, v2d)
    return out.reshape(B, H, S, Hd).transpose(0, 2, 1, 3).reshape(B * S, D)


# ----------------------------------------------------------------------------
# Parameter preparation (done ONCE, outside the forward):
#  * fold 1/sqrt(head_dim) into the q columns of Wqkv / bqkv,
#  * cast matmul weights to the compute dtype (bf16 path),
#  * keep LayerNorm params and biases in f32.
# ----------------------------------------------------------------------------
def prepare_params(params, compute_dtype=None):
    D = params["wqkv"].shape[0]
    H = params["num_heads"]
    Hd = D // H
    cd = (jnp.dtype(compute_dtype) if compute_dtype is not None
          else jnp.dtype(params["wqkv"].dtype))
    scale = 1.0 / math.sqrt(Hd)
    wqkv = jnp.asarray(params["wqkv"], jnp.float32).at[:, :D].multiply(scale)
    bqkv = jnp.asarray(params["bqkv"], jnp.float32).at[:D].multiply(scale)
    return {
        "num_heads": H,
        "compute_dtype": cd,
        "ln1_w": jnp.asarray(params["ln1_w"], jnp.float32),
        "ln1_b": jnp.asarray(params["ln1_b"], jnp.float32),
        "ln2_w": jnp.asarray(params["ln2_w"], jnp.float32),
        "ln2_b": jnp.asarray(params["ln2_b"], jnp.float32),
        "wqkv": wqkv.astype(cd), "bqkv": bqkv,
        "wout": jnp.asarray(params["wout"], cd),
        "bout": jnp.asarray(params["bout"], jnp.float32),
        "wfc1": jnp.asarray(params["wfc1"], cd),
        "bfc1": jnp.asarray(params["bfc1"], jnp.float32),
        "wfc2": jnp.asarray(params["wfc2"], cd),
        "bfc2": jnp.asarray(params["bfc2"], jnp.float32),
    }


# ----------------------------------------------------------------------------
# Block forward (prenorm=True):
#   residual = hidden + residual ; h = LN1(residual) ; h = MHA(h)
#   residual = h + residual      ; h = LN2(residual) ; h = MLP(h)
#   return (h, residual)
# ----------------------------------------------------------------------------
def block_forward(prepared, hidden_states, residual=None):
    B, S, D = hidden_states.shape
    H = prepared["num_heads"]
    Hd = D // H
    cd = prepared["compute_dtype"]

    x = hidden_states.reshape(B * S, D)
    res = (residual.reshape(B * S, D) if residual is not None
           else jnp.zeros_like(x))  # residual=None => residual := dropped(hidden)

    # dropout1 (p=0, eval) -> add -> norm1 (LN output emitted in compute dtype)
    h, res = add_layernorm(x, res, prepared["ln1_w"], prepared["ln1_b"],
                           out_dtype=cd)

    # mixer: multi-head self-attention (scale pre-folded into wqkv/bqkv)
    qkv = linear(h, prepared["wqkv"], prepared["bqkv"])           # (B*S, 3D)
    attn = multihead_attention(qkv, B, S, H, Hd)                  # (B*S, D)
    mixer_out = linear(attn, prepared["wout"], prepared["bout"])  # (B*S, D)

    # dropout2 (p=0, eval) -> add -> norm2
    h, res = add_layernorm(mixer_out, res, prepared["ln2_w"], prepared["ln2_b"],
                           out_dtype=cd)

    # mlp: fc1 -> GELU -> fc2
    h = linear(h, prepared["wfc1"], prepared["bfc1"], activation="gelu")
    out = linear(h, prepared["wfc2"], prepared["bfc2"])

    return out.reshape(B, S, D), res.reshape(B, S, D)


# ----------------------------------------------------------------------------
# Pure-JAX reference for correctness checks (unscaled weights).
# ----------------------------------------------------------------------------
def block_forward_ref(params, hidden_states, residual=None):
    B, S, D = hidden_states.shape
    H = params["num_heads"]
    Hd = D // H
    eps = 1e-5

    def ln(x, w, b):
        mu = jnp.mean(x, -1, keepdims=True)
        var = jnp.mean((x - mu) ** 2, -1, keepdims=True)
        return (x - mu) * jax.lax.rsqrt(var + eps) * w + b

    res = hidden_states if residual is None else hidden_states + residual
    h = ln(res, params["ln1_w"], params["ln1_b"])
    qkv = h @ params["wqkv"] + params["bqkv"]
    qkv = qkv.reshape(B, S, 3, H, Hd)
    q, k, v = (qkv[:, :, i].transpose(0, 2, 1, 3) for i in range(3))
    s = jnp.einsum("bhqd,bhkd->bhqk", q, k) / math.sqrt(Hd)
    p = jax.nn.softmax(s, -1)
    a = jnp.einsum("bhqk,bhkd->bhqd", p, v).transpose(0, 2, 1, 3).reshape(B, S, D)
    mixer_out = a @ params["wout"] + params["bout"]
    res = mixer_out + res
    h = ln(res, params["ln2_w"], params["ln2_b"])
    h = jax.nn.gelu(h @ params["wfc1"] + params["bfc1"], approximate=False)
    out = h @ params["wfc2"] + params["bfc2"]
    return out, res


def make_params(key, dim, num_heads, mlp_ratio=4):
    hidden = dim * mlp_ratio
    ks = jax.random.split(key, 8)
    scale = 0.05
    return {
        "num_heads": num_heads,
        "ln1_w": jnp.ones((dim,), jnp.float32),
        "ln1_b": jnp.zeros((dim,), jnp.float32),
        "ln2_w": jnp.ones((dim,), jnp.float32),
        "ln2_b": jnp.zeros((dim,), jnp.float32),
        "wqkv": scale * jax.random.normal(ks[0], (dim, 3 * dim), jnp.float32),
        "bqkv": scale * jax.random.normal(ks[1], (3 * dim,), jnp.float32),
        "wout": scale * jax.random.normal(ks[2], (dim, dim), jnp.float32),
        "bout": scale * jax.random.normal(ks[3], (dim,), jnp.float32),
        "wfc1": scale * jax.random.normal(ks[4], (dim, hidden), jnp.float32),
        "bfc1": scale * jax.random.normal(ks[5], (hidden,), jnp.float32),
        "wfc2": scale * jax.random.normal(ks[6], (hidden, dim), jnp.float32),
        "bfc2": scale * jax.random.normal(ks[7], (dim,), jnp.float32),
    }


if __name__ == "__main__":
    def run_case(B, S, D, H, *, compute_dtype=None, tol=5e-3):
        key = jax.random.PRNGKey(0)
        kp, kx, kr = jax.random.split(key, 3)
        params = make_params(kp, D, H)
        prepared = prepare_params(params, compute_dtype)
        hidden_states = jax.random.normal(kx, (B, S, D), jnp.float32)
        residual = jax.random.normal(kr, (B, S, D), jnp.float32)

        out, new_res = block_forward(prepared, hidden_states, residual)
        out = jax.block_until_ready(out)
        new_res = jax.block_until_ready(new_res)

        ref_out, ref_res = block_forward_ref(params, hidden_states, residual)
        assert jnp.allclose(out.astype(jnp.float32), ref_out,
                            atol=tol, rtol=tol), \
            f"out mismatch B={B} S={S} D={D} H={H} dtype={compute_dtype}"
        assert jnp.allclose(new_res.astype(jnp.float32), ref_res,
                            atol=tol, rtol=tol), \
            f"residual mismatch B={B} S={S} D={D} H={H} dtype={compute_dtype}"

    # f32, head_dim=128 -> single-head-per-step slab attention path
    run_case(2, 16, 256, 2, tol=5e-3)
    # f32, head_dim=64  -> 2-heads-per-step 128-lane slab attention path
    run_case(2, 16, 128, 2, tol=5e-3)
    # bf16 matmul inputs (f32 accumulation, f32 LN/softmax stats), loose check
    run_case(2, 16, 256, 2, compute_dtype=jnp.bfloat16, tol=1e-1)

    # TODO(synk): dropout / drop_path are identity here (p=0, eval mode); a
    # training-mode version would use pltpu.prng_seed + stateful_bernoulli.
    print("KERNEL_OK")
</pallas_src>

<mosaic_0001>
module attributes {stable_mosaic.version = 11 : i64} {
  func.func @_add_ln_kernel(%arg0: i32, %arg1: memref<16x256xf32, #tpu.memory_space<vmem>>, %arg2: memref<16x256xf32, #tpu.memory_space<vmem>>, %arg3: memref<1x256xf32, #tpu.memory_space<vmem>>, %arg4: memref<1x256xf32, #tpu.memory_space<vmem>>, %arg5: memref<16x256xf32, #tpu.memory_space<vmem>>, %arg6: memref<16x256xf32, #tpu.memory_space<vmem>>) attributes {dimension_semantics = [#tpu.dimension_semantics<parallel>], iteration_bounds = array<i64: 2>, scalar_prefetch = 0 : i64, scratch_operands = 0 : i64, tpu.core_type = #tpu.core_type<tc>, window_params = [{transform_indices = @transform_0, window_bounds = array<i64: 16, 256>}, {transform_indices = @transform_1, window_bounds = array<i64: 16, 256>}, {pipeline_mode = #tpu.pipeline_mode<synchronous>, transform_indices = @transform_2, window_bounds = array<i64: 1, 256>}, {pipeline_mode = #tpu.pipeline_mode<synchronous>, transform_indices = @transform_3, window_bounds = array<i64: 1, 256>}, {transform_indices = @transform_4, window_bounds = array<i64: 16, 256>}, {transform_indices = @transform_5, window_bounds = array<i64: 16, 256>}]} {
    %c0 = arith.constant 0 : index
    %c0_0 = arith.constant 0 : index
    %0 = vector.load %arg1[%c0, %c0_0] : memref<16x256xf32, #tpu.memory_space<vmem>>, vector<16x256xf32>
    %c0_1 = arith.constant 0 : index
    %c0_2 = arith.constant 0 : index
    %1 = vector.load %arg2[%c0_1, %c0_2] : memref<16x256xf32, #tpu.memory_space<vmem>>, vector<16x256xf32>
    %2 = arith.addf %0, %1 : vector<16x256xf32>
    %c0_3 = arith.constant 0 : index
    %c0_4 = arith.constant 0 : index
    %3 = vector.load %arg6[%c0_3, %c0_4] : memref<16x256xf32, #tpu.memory_space<vmem>>, vector<16x256xf32>
    tpu.vector_store %arg6[%c0_3, %c0_4], %2 {strides = array<i32>} : memref<16x256xf32, #tpu.memory_space<vmem>>, vector<16x256xf32>,
    %cst = arith.constant dense<0.000000e+00> : vector<16xf32>
    %4 = vector.multi_reduction <add>, %2, %cst [1] : vector<16x256xf32> to vector<16xf32>
    %5 = vector.shape_cast %4 : vector<16xf32> to vector<16x1xf32>
    %cst_5 = arith.constant 2.560000e+02 : f32
    %6 = vector.broadcast %cst_5 : f32 to vector<16x1xf32>
    %7 = arith.divf %5, %6 : vector<16x1xf32>
    %8 = vector.broadcast %7 : vector<16x1xf32> to vector<16x256xf32>
    %9 = arith.subf %2, %8 : vector<16x256xf32>
    %10 = arith.mulf %9, %9 : vector<16x256xf32>
    %cst_6 = arith.constant dense<0.000000e+00> : vector<16xf32>
    %11 = vector.multi_reduction <add>, %10, %cst_6 [1] : vector<16x256xf32> to vector<16xf32>
    %12 = vector.shape_cast %11 : vector<16xf32> to vector<16x1xf32>
    %cst_7 = arith.constant 2.560000e+02 : f32
    %13 = vector.broadcast %cst_7 : f32 to vector<16x1xf32>
    %14 = arith.divf %12, %13 : vector<16x1xf32>
    %cst_8 = arith.constant 9.99999974E-6 : f32
    %15 = vector.broadcast %cst_8 : f32 to vector<16x1xf32>
    %16 = arith.addf %14, %15 : vector<16x1xf32>
    %17 = math.rsqrt %16 : vector<16x1xf32>
    %18 = vector.broadcast %17 : vector<16x1xf32> to vector<16x256xf32>
    %19 = arith.mulf %9, %18 : vector<16x256xf32>
    %c0_9 = arith.constant 0 : index
    %c0_10 = arith.constant 0 : index
    %20 = vector.load %arg3[%c0_9, %c0_10] : memref<1x256xf32, #tpu.memory_space<vmem>>, vector<1x256xf32>
    %21 = vector.broadcast %20 : vector<1x256xf32> to vector<16x256xf32>
    %22 = arith.mulf %19, %21 : vector<16x256xf32>
    %c0_11 = arith.constant 0 : index
    %c0_12 = arith.constant 0 : index
    %23 = vector.load %arg4[%c0_11, %c0_12] : memref<1x256xf32, #tpu.memory_space<vmem>>, vector<1x256xf32>
    %24 = vector.broadcast %23 : vector<1x256xf32> to vector<16x256xf32>
    %25 = arith.addf %22, %24 : vector<16x256xf32>
    %c0_13 = arith.constant 0 : index
    %c0_14 = arith.constant 0 : index
    %26 = vector.load %arg5[%c0_13, %c0_14] : memref<16x256xf32, #tpu.memory_space<vmem>>, vector<16x256xf32>
    tpu.vector_store %arg5[%c0_13, %c0_14], %25 {strides = array<i32>} : memref<16x256xf32, #tpu.memory_space<vmem>>, vector<16x256xf32>,
    return
  }
  func.func @transform_0(%arg0: i32) -> (i32, i32) {
    %c0_i32 = arith.constant 0 : i32
    %c0_i32_0 = arith.constant 0 : i32
    return %arg0, %c0_i32 : i32, i32
  }
  func.func @transform_1(%arg0: i32) -> (i32, i32) {
    %c0_i32 = arith.constant 0 : i32
    %c0_i32_0 = arith.constant 0 : i32
    return %arg0, %c0_i32 : i32, i32
  }
  func.func @transform_2(%arg0: i32) -> (i32, i32) {
    %c0_i32 = arith.constant 0 : i32
    %c0_i32_0 = arith.constant 0 : i32
    %c0_i32_1 = arith.constant 0 : i32
    return %c0_i32, %c0_i32_0 : i32, i32
  }
  func.func @transform_3(%arg0: i32) -> (i32, i32) {
    %c0_i32 = arith.constant 0 : i32
    %c0_i32_0 = arith.constant 0 : i32
    %c0_i32_1 = arith.constant 0 : i32
    return %c0_i32, %c0_i32_0 : i32, i32
  }
  func.func @transform_4(%arg0: i32) -> (i32, i32) {
    %c0_i32 = arith.constant 0 : i32
    %c0_i32_0 = arith.constant 0 : i32
    return %arg0, %c0_i32 : i32, i32
  }
  func.func @transform_5(%arg0: i32) -> (i32, i32) {
    %c0_i32 = arith.constant 0 : i32
    %c0_i32_0 = arith.constant 0 : i32
    return %arg0, %c0_i32 : i32, i32
  }
}

</mosaic_0001>

<llo_original>
// kernel: tpu_custom_call.1
$region0: #{tpu_custom_call.1}
  #allocation0 [shape = 'u32[]', space=smem, size = 0x4, offset = 0x4, fixed_abs, tag = 'smem constant byte address 0x4 - core index']
  #allocation1 [shape = 'u32[144,128]{1,0:T(1,128)}', space=vmem, size = 0x12000, scoped, tag = 'internal scratch']
  %s0 = inlined_call_operand.hbm [shape: f32[32,256], index: 0, kind: input, shape index: {}]
  %s1 = inlined_call_operand.hbm [shape: f32[32,256], index: 1, kind: input, shape index: {}]
  %s2 = inlined_call_operand.vmem [shape: f32[1,256], index: 2, kind: input, shape index: {}]
  %s3 = inlined_call_operand.vmem [shape: f32[1,256], index: 3, kind: input, shape index: {}]
  %s4 = inlined_call_operand.hbm [shape: f32[32,256], index: 4, kind: output, shape index: {0}]
  %s5 = inlined_call_operand.hbm [shape: f32[32,256], index: 5, kind: output, shape index: {1}]
  %6 = xla_tuple %s4, %s5
  %s7 = sld [smem:[#allocation0]]
  $region65: #{tpu_custom_call.1} parent=0
    _
  %s9 = ssub.s32 1, %s7
  %s10 = scalar_select 0, %s9, %s7
  $region1: #{tpu_custom_call.1} parent=0
    #allocation2 [shape = 'u8[32768]{0}', space=vmem, size = 0x8000, scoped, tag = 'input window, operand 0']
    #allocation3 [shape = 's32[2]{0}', space=sflag, size = 0x8, scoped, tag = 'scoped memory for tpu_custom_call.1']
    #allocation4 [shape = 's32[2]{0}', space=sflag, size = 0x8, scoped, tag = 'scoped memory for tpu_custom_call.1']
    #allocation5 [shape = 'u8[32768]{0}', space=vmem, size = 0x8000, scoped, tag = 'input window, operand 1']
    #allocation6 [shape = 's32[2]{0}', space=sflag, size = 0x8, scoped, tag = 'scoped memory for tpu_custom_call.1']
    #allocation7 [shape = 'u8[32768]{0}', space=vmem, size = 0x8000, scoped, tag = 'output window, operand 0']
    #allocation8 [shape = 'u8[32768]{0}', space=vmem, size = 0x8000, scoped, tag = 'output window, operand 1']
    #allocation9 [shape = 's32[2]{0}', space=sflag, size = 0x8, scoped, tag = 'scoped memory for tpu_custom_call.1']
    %11 = vsyncpa [#allocation3], 0
    %s12 = scalar_lea.sflag [#allocation3], 1
    %13 = vsyncpa %s12, 0
    %14 = vsyncpa [#allocation6], 0
    %s15 = scalar_lea.sflag [#allocation6], 1
    %16 = vsyncpa %s15, 0
    %17 = vsyncpa [#allocation4], 0
    %s18 = scalar_lea.sflag [#allocation4], 1
    %19 = vsyncpa %s18, 0
    %20 = vsyncpa [#allocation9], 0
    %s21 = scalar_lea.sflag [#allocation9], 1
    %22 = vsyncpa %s21, 0
    loop: start=0, step=1, limit=4
    $region2: #{tpu_custom_call.1} parent=1 // loop_pre_header
      _
    $region3: #{tpu_custom_call.1} parent=1 // loop_header
      %s24 = sphi 0, %s28
      %p25 = scmp.ge.s32.totalorder %s24, 4
      %s34 = sphi 0, %s36
      %s37 = sphi 0, %s34
      %s38 = sphi 0, %s37
      %s54 = sphi 0, %s38
      %s60 = sphi 0, %s62
      %s63 = sphi 0, %s60
      %s64 = sphi 0, %s63
      %s80 = sphi 0, %s64
      %s84 = sphi 0, %s84
      %s86 = sphi 0, %s84
      %s87 = sphi 0, %s86
      %s101 = sphi 0, %s87
      %s105 = sphi 0, %s105
      %s107 = sphi 0, %s105
      %s108 = sphi 0, %s107
      %s122 = sphi 0, %s108
      %s128 = sphi 0, %s130
      %s131 = sphi 0, %s128
      %s132 = sphi 0, %s131
      %s148 = sphi 0, %s132
      %s154 = sphi 0, %s156
      %s157 = sphi 0, %s154
      %s158 = sphi 0, %s157
      %s174 = sphi 0, %s158
    $region4: #{tpu_custom_call.1} parent=1 // loop_header_branch
      %27 = sbr.rel (%p25) target = $region8
    $region5: #{tpu_custom_call.1} parent=1 // loop_body
      %s29 = ssub.s32 %s24, 1
      %s30 = ssub.s32 %s24, 2
      %s31 = sadd.s32 %s24, 1
      %s32 = ssub.s32 %s24, %s31
      %p33 = scmp.eq.s32.totalorder %s32, 0
      %s35 = sadd.s32 %s34, 1
      %s36 = scalar_select %p33, %s34, %s35
      %p39 = pneg %p33
      %p40 = scmp.eq.s32.totalorder %s24, 1
      %p41 = por %p39, %p40
      %p42 = scmp.ne.s32.totalorder %s34, %s37
      %p43 = scmp.eq.s32.totalorder %s24, 0
      %p44 = por %p42, %p43
      %p45 = scmp.ne.s32.totalorder %s34, %s37
      %p46 = scmp.eq.s32.totalorder %s29, 1
      %p47 = por %p45, %p46
      %p48 = scmp.ne.s32.totalorder %s37, %s38
      %p49 = scmp.eq.s32.totalorder %s29, 0
      %p50 = por %p48, %p49
      %p51 = scmp.ne.s32.totalorder %s37, %s38
      %p52 = scmp.eq.s32.totalorder %s30, 1
      %p53 = por %p51, %p52
      %p55 = scmp.ne.s32.totalorder %s38, %s54
      %p56 = scmp.eq.s32.totalorder %s30, 0
      %p57 = por %p55, %p56
      %s58 = ssub.s32 %s24, %s31
      %p59 = scmp.eq.s32.totalorder %s58, 0
      %s61 = sadd.s32 %s60, 1
      %s62 = scalar_select %p59, %s60, %s61
      %p65 = pneg %p59
      %p66 = scmp.eq.s32.totalorder %s24, 1
      %p67 = por %p65, %p66
      %p68 = scmp.ne.s32.totalorder %s60, %s63
      %p69 = scmp.eq.s32.totalorder %s24, 0
      %p70 = por %p68, %p69
      %p71 = scmp.ne.s32.totalorder %s60, %s63
      %p72 = scmp.eq.s32.totalorder %s29, 1
      %p73 = por %p71, %p72
      %p74 = scmp.ne.s32.totalorder %s63, %s64
      %p75 = scmp.eq.s32.totalorder %s29, 0
      %p76 = por %p74, %p75
      %p77 = scmp.ne.s32.totalorder %s63, %s64
      %p78 = scmp.eq.s32.totalorder %s30, 1
      %p79 = por %p77, %p78
      %p81 = scmp.ne.s32.totalorder %s64, %s80
      %p82 = scmp.eq.s32.totalorder %s30, 0
      %p83 = por %p81, %p82
      %s85 = sadd.s32 %s84, 1
      %p88 = scmp.eq.s32.totalorder %s24, 1
      %p89 = scmp.ne.s32.totalorder %s84, %s86
      %p90 = scmp.eq.s32.totalorder %s24, 0
      %p91 = por %p89, %p90
      %p92 = scmp.ne.s32.totalorder %s84, %s86
      %p93 = scmp.eq.s32.totalorder %s29, 1
      %p94 = por %p92, %p93
      %p95 = scmp.ne.s32.totalorder %s86, %s87
      %p96 = scmp.eq.s32.totalorder %s29, 0
      %p97 = por %p95, %p96
      %p98 = scmp.ne.s32.totalorder %s86, %s87
      %p99 = scmp.eq.s32.totalorder %s30, 1
      %p100 = por %p98, %p99
      %p102 = scmp.ne.s32.totalorder %s87, %s101
      %p103 = scmp.eq.s32.totalorder %s30, 0
      %p104 = por %p102, %p103
      %s106 = sadd.s32 %s105, 1
      %p109 = scmp.eq.s32.totalorder %s24, 1
      %p110 = scmp.ne.s32.totalorder %s105, %s107
      %p111 = scmp.eq.s32.totalorder %s24, 0
      %p112 = por %p110, %p111
      %p113 = scmp.ne.s32.totalorder %s105, %s107
      %p114 = scmp.eq.s32.totalorder %s29, 1
      %p115 = por %p113, %p114
      %p116 = scmp.ne.s32.totalorder %s107, %s108
      %p117 = scmp.eq.s32.totalorder %s29, 0
      %p118 = por %p116, %p117
      %p119 = scmp.ne.s32.totalorder %s107, %s108
      %p120 = scmp.eq.s32.totalorder %s30, 1
      %p121 = por %p119, %p120
      %p123 = scmp.ne.s32.totalorder %s108, %s122
      %p124 = scmp.eq.s32.totalorder %s30, 0
      %p125 = por %p123, %p124
      %s126 = ssub.s32 %s24, %s31
      %p127 = scmp.eq.s32.totalorder %s126, 0
      %s129 = sadd.s32 %s128, 1
      %s130 = scalar_select %p127, %s128, %s129
      %p133 = pneg %p127
      %p134 = scmp.eq.s32.totalorder %s24, 1
      %p135 = por %p133, %p134
      %p136 = scmp.ne.s32.totalorder %s128, %s131
      %p137 = scmp.eq.s32.totalorder %s24, 0
      %p138 = por %p136, %p137
      %p139 = scmp.ne.s32.totalorder %s128, %s131
      %p140 = scmp.eq.s32.totalorder %s29, 1
      %p141 = por %p139, %p140
      %p142 = scmp.ne.s32.totalorder %s131, %s132
      %p143 = scmp.eq.s32.totalorder %s29, 0
      %p144 = por %p142, %p143
      %p145 = scmp.ne.s32.totalorder %s131, %s132
      %p146 = scmp.eq.s32.totalorder %s30, 1
      %p147 = por %p145, %p146
      %p149 = scmp.ne.s32.totalorder %s132, %s148
      %p150 = scmp.eq.s32.totalorder %s30, 0
      %p151 = por %p149, %p150
      %s152 = ssub.s32 %s24, %s31
      %p153 = scmp.eq.s32.totalorder %s152, 0
      %s155 = sadd.s32 %s154, 1
      %s156 = scalar_select %p153, %s154, %s155
      %p159 = pneg %p153
      %p160 = scmp.eq.s32.totalorder %s24, 1
      %p161 = por %p159, %p160
      %p162 = scmp.ne.s32.totalorder %s154, %s157
      %p163 = scmp.eq.s32.totalorder %s24, 0
      %p164 = por %p162, %p163
      %p165 = scmp.ne.s32.totalorder %s154, %s157
      %p166 = scmp.eq.s32.totalorder %s29, 1
      %p167 = por %p165, %p166
      %p168 = scmp.ne.s32.totalorder %s157, %s158
      %p169 = scmp.eq.s32.totalorder %s29, 0
      %p170 = por %p168, %p169
      %p171 = scmp.ne.s32.totalorder %s157, %s158
      %p172 = scmp.eq.s32.totalorder %s30, 1
      %p173 = por %p171, %p172
      %p175 = scmp.ne.s32.totalorder %s158, %s174
      %p176 = scmp.eq.s32.totalorder %s30, 0
      %p177 = por %p175, %p176
      %p178 = scmp.le.s32.totalorder 1, %s24
      %p179 = scmp.lt.s32.totalorder %s24, 3
      %p180 = pnand %p178, %p179
      %p181 = pneg %p180
      // Predicated region
      $region9: #{tpu_custom_call.1} parent=5 // pred_check
        _
      $region10: #{tpu_custom_call.1} parent=5 // pred_check_branch
        %183 = sbr.rel (%p180) target = $region12
      $region11: #{tpu_custom_call.1} parent=5 // pred_region
        %s184 = ssub.s32 %s24, 1
        // Predicated region
        $region13: #{tpu_custom_call.1} parent=11 // pred_check
          %p185 = pneg %p97
        $region14: #{tpu_custom_call.1} parent=11 // pred_check_branch
          %187 = sbr.rel (%p185) target = $region16
        $region15: #{tpu_custom_call.1} parent=11 // pred_region
          _
        $region16: #{tpu_custom_call.1} parent=11 // pred_fallthru
          _
        // Predicated region
        $region17: #{tpu_custom_call.1} parent=11 // pred_check
          %p188 = pneg %p118
        $region18: #{tpu_custom_call.1} parent=11 // pred_check_branch
          %190 = sbr.rel (%p188) target = $region20
        $region19: #{tpu_custom_call.1} parent=11 // pred_region
          _
        $region20: #{tpu_custom_call.1} parent=11 // pred_fallthru
          _
      $region12: #{tpu_custom_call.1} parent=5 // pred_fallthru
        _
      %p191 = scmp.lt.s32.totalorder %s24, 2
      // Predicated region
      $region21: #{tpu_custom_call.1} parent=5 // pred_check
        %p192 = pneg %p191
      $region22: #{tpu_custom_call.1} parent=5 // pred_check_branch
        %194 = sbr.rel (%p192) target = $region24
      $region23: #{tpu_custom_call.1} parent=5 // pred_region
        // Predicated region
        $region25: #{tpu_custom_call.1} parent=23 // pred_check
          %p195 = pneg %p44
        $region26: #{tpu_custom_call.1} parent=23 // pred_check_branch
          %197 = sbr.rel (%p195) target = $region28
        $region27: #{tpu_custom_call.1} parent=23 // pred_region
          %s198 = sand.u32 %s34, 1
          %s199 = scalar_lea.sflag [#allocation3], %s198
          %s200 = sand.u32 %s34, 1
          %s201 = smul.addr %s200, 32
          %s202 = scalar_lea.vmem [#allocation2], %s201
          %s203 = smul.u32 2, %s24
          %s205 = ssub.s32 512, 512
          %206 = vsyncadd %s199, %s205
          %s207 = smul.addr %s203, 2
          %s208 = smul.addr %s207, 128
          %s209 = scalar_lea.hbm %s0, %s208
          %s210 = sshll.u32 %s202, 4
          %s211 = int_to_ptr.vmem [resolvable:$true] %s210
          %216 = dma.hbm_to_vmem [thread:$0]  %s209, 512, %s211, %s199, 256, 256, 16
        $region28: #{tpu_custom_call.1} parent=23 // pred_fallthru
          _
        // Predicated region
        $region29: #{tpu_custom_call.1} parent=23 // pred_check
          %p217 = pneg %p70
        $region30: #{tpu_custom_call.1} parent=23 // pred_check_branch
          %219 = sbr.rel (%p217) target = $region32
        $region31: #{tpu_custom_call.1} parent=23 // pred_region
          %s220 = sand.u32 %s60, 1
          %s221 = scalar_lea.sflag [#allocation6], %s220
          %s222 = sand.u32 %s60, 1
          %s223 = smul.addr %s222, 32
          %s224 = scalar_lea.vmem [#allocation5], %s223
          %s225 = smul.u32 2, %s24
          %s227 = ssub.s32 512, 512
          %228 = vsyncadd %s221, %s227
          %s229 = smul.addr %s225, 2
          %s230 = smul.addr %s229, 128
          %s231 = scalar_lea.hbm %s1, %s230
          %s232 = sshll.u32 %s224, 4
          %s233 = int_to_ptr.vmem [resolvable:$true] %s232
          %238 = dma.hbm_to_vmem [thread:$0]  %s231, 512, %s233, %s221, 256, 256, 16
        $region32: #{tpu_custom_call.1} parent=23 // pred_fallthru
          _
      $region24: #{tpu_custom_call.1} parent=5 // pred_fallthru
        _
      %p239 = scmp.le.s32.totalorder 1, %s24
      %p240 = scmp.lt.s32.totalorder %s24, 3
      %p241 = pnand %p239, %p240
      %p242 = pneg %p241
      // Predicated region
      $region33: #{tpu_custom_call.1} parent=5 // pred_check
        _
      $region34: #{tpu_custom_call.1} parent=5 // pred_check_branch
        %244 = sbr.rel (%p241) target = $region36
      $region35: #{tpu_custom_call.1} parent=5 // pred_region
        %s245 = ssub.s32 %s24, 1
        %s246 = sand.u32 %s37, 1
        %s247 = scalar_lea.sflag [#allocation3], %s246
        %s248 = sand.u32 %s37, 1
        %s249 = smul.addr %s248, 32
        %s250 = scalar_lea.vmem [#allocation2], %s249
        // Predicated region
        $region37: #{tpu_custom_call.1} parent=35 // pred_check
          %p251 = pneg %p50
        $region38: #{tpu_custom_call.1} parent=35 // pred_check_branch
          %253 = sbr.rel (%p251) target = $region40
        $region39: #{tpu_custom_call.1} parent=35 // pred_region
          %254 = dma.done %s247, 512
        $region40: #{tpu_custom_call.1} parent=35 // pred_fallthru
          _
        %s255 = sand.u32 %s63, 1
        %s256 = scalar_lea.sflag [#allocation6], %s255
        %s257 = sand.u32 %s63, 1
        %s258 = smul.addr %s257, 32
        %s259 = scalar_lea.vmem [#allocation5], %s258
        // Predicated region
        $region41: #{tpu_custom_call.1} parent=35 // pred_check
          %p260 = pneg %p76
        $region42: #{tpu_custom_call.1} parent=35 // pred_check_branch
          %262 = sbr.rel (%p260) target = $region44
        $region43: #{tpu_custom_call.1} parent=35 // pred_region
          %263 = dma.done %s256, 512
        $region44: #{tpu_custom_call.1} parent=35 // pred_fallthru
          _
        %s264 = sand.u32 %s37, 1
        %s265 = scalar_lea.sflag [#allocation3], %s264
        %s266 = sand.u32 %s37, 1
        %s267 = smul.addr %s266, 32
        %s268 = scalar_lea.vmem [#allocation2], %s267
        %p269 = pneg %p50
        %p270 = pneg %p47
        %s271 = sand.u32 %s63, 1
        %s272 = scalar_lea.sflag [#allocation6], %s271
        %s273 = sand.u32 %s63, 1
        %s274 = smul.addr %s273, 32
        %s275 = scalar_lea.vmem [#allocation5], %s274
        %p276 = pneg %p76
        %p277 = pneg %p73
        %p278 = pneg %p97
        %p279 = pneg %p94
        %p280 = pneg %p118
        %p281 = pneg %p115
        %p282 = pneg %p144
        %p283 = pneg %p141
        %s284 = sand.u32 %s131, 1
        %s285 = scalar_lea.sflag [#allocation4], %s284
        %s286 = sand.u32 %s131, 1
        %s287 = smul.addr %s286, 32
        %s288 = scalar_lea.vmem [#allocation7], %s287
        %p289 = pneg %p170
        %p290 = pneg %p167
        %s291 = sand.u32 %s157, 1
        %s292 = scalar_lea.sflag [#allocation9], %s291
        %s293 = sand.u32 %s157, 1
        %s294 = smul.addr %s293, 32
        %s295 = scalar_lea.vmem [#allocation8], %s294
        %s296 = smul.u32 2, %s29
        %s297 = smul.u32 2, %s29
        %s298 = smul.u32 2, %s29
        %s299 = smul.u32 2, %s29
        %v300 = vld [vmem:[%s250] sm:$0xff]
        %v301 = vld [vmem:[%s250 + $0x8] sm:$0xff]
        %v302 = vld [vmem:[%s250 + $0x10] sm:$0xff]
        %v303 = vld [vmem:[%s250 + $0x18] sm:$0xff]
        %v304 = vld [vmem:[%s259] sm:$0xff]
        %v305 = vld [vmem:[%s259 + $0x8] sm:$0xff]
        %v306 = vld [vmem:[%s259 + $0x10] sm:$0xff]
        %v307 = vld [vmem:[%s259 + $0x18] sm:$0xff]
        %v308 = vadd.f32 %v300, %v304
        %v309 = vadd.f32 %v301, %v305
        %v310 = vadd.f32 %v302, %v306
        %v311 = vadd.f32 %v303, %v307
        %312 = vst [vmem:[%s295] sm:$0xff] %v308
        %313 = vst [vmem:[%s295 + $0x8] sm:$0xff] %v309
        %314 = vst [vmem:[%s295 + $0x10] sm:$0xff] %v310
        %315 = vst [vmem:[%s295 + $0x18] sm:$0xff] %v311
        %v316 = vadd.f32 %v308, %v309
        %317 = vadd.xlane.f32.xlu0 %v316
        %v318 = vpop.xlane.xlu0 %317
        %v319 = vadd.f32 %v310, %v311
        %320 = vadd.xlane.f32.xlu0 %v319
        %v321 = vpop.xlane.xlu0 %320
        %v322 = vrcp.pop 256.0
        %v323 = vmul.f32 %v318, %v322
        %v324 = vmul.f32 %v321, %v322
        %v325 = vsub.f32 %v308, %v323
        %v326 = vsub.f32 %v309, %v323
        %v327 = vsub.f32 %v310, %v324
        %v328 = vsub.f32 %v311, %v324
        %v329 = vmul.f32 %v325, %v325
        %v330 = vmul.f32 %v326, %v326
        %v331 = vmul.f32 %v327, %v327
        %v332 = vmul.f32 %v328, %v328
        %v333 = vadd.f32 %v329, %v330
        %334 = vadd.xlane.f32.xlu0 %v333
        %v335 = vpop.xlane.xlu0 %334
        %v336 = vadd.f32 %v331, %v332
        %337 = vadd.xlane.f32.xlu0 %v336
        %v338 = vpop.xlane.xlu0 %337
        %v339 = vmul.f32 %v335, %v322
        %v340 = vmul.f32 %v338, %v322
        %v341 = vadd.f32 %v339, 1e-05
        %v342 = vadd.f32 %v340, 1e-05
        %v343 = vrsqrt.pop %v341
        %v344 = vrsqrt.pop %v342
        %v345 = vmul.f32 %v325, %v343
        %v346 = vmul.f32 %v326, %v343
        %v347 = vmul.f32 %v327, %v344
        %v348 = vmul.f32 %v328, %v344
        %v349 = vld [vmem:[%s2] sm:$0x3]
        %v351 = vlaneseq
        %v352 = vshrl.u32 %v351, 7
        %v353 = vsub.s32 0, %v352
        %v354 = vrot.slane %v349, %v353
        %v355 = vlaneseq
        %v356 = vshrl.u32 %v355, 7
        %v357 = vsub.s32 1, %v356
        %v358 = vrot.slane %v349, %v357
        %v361 = vmul.f32 %v345, %v354
        %v362 = vmul.f32 %v346, %v358
        %v363 = vmul.f32 %v347, %v354
        %v364 = vmul.f32 %v348, %v358
        %v365 = vld [vmem:[%s3] sm:$0x3]
        %v367 = vlaneseq
        %v368 = vshrl.u32 %v367, 7
        %v369 = vsub.s32 0, %v368
        %v370 = vrot.slane %v365, %v369
        %v371 = vlaneseq
        %v372 = vshrl.u32 %v371, 7
        %v373 = vsub.s32 1, %v372
        %v374 = vrot.slane %v365, %v373
        %v377 = vadd.f32 %v361, %v370
        %v378 = vadd.f32 %v362, %v374
        %v379 = vadd.f32 %v363, %v370
        %v380 = vadd.f32 %v364, %v374
        %381 = vst [vmem:[%s288] sm:$0xff] %v377
        %382 = vst [vmem:[%s288 + $0x8] sm:$0xff] %v378
        %383 = vst [vmem:[%s288 + $0x10] sm:$0xff] %v379
        %384 = vst [vmem:[%s288 + $0x18] sm:$0xff] %v380
        %s385 = sand.u32 %s131, 1
        %s386 = scalar_lea.sflag [#allocation4], %s385
        %s387 = sand.u32 %s131, 1
        %s388 = smul.addr %s387, 32
        %s389 = scalar_lea.vmem [#allocation7], %s388
        %s390 = sand.u32 %s157, 1
        %s391 = scalar_lea.sflag [#allocation9], %s390
        %s392 = sand.u32 %s157, 1
        %s393 = smul.addr %s392, 32
        %s394 = scalar_lea.vmem [#allocation8], %s393
        // Predicated region
        $region45: #{tpu_custom_call.1} parent=35 // pred_check
          %p395 = pneg %p141
        $region46: #{tpu_custom_call.1} parent=35 // pred_check_branch
          %397 = sbr.rel (%p395) target = $region48
        $region47: #{tpu_custom_call.1} parent=35 // pred_region
          %s398 = smul.u32 2, %s29
          %s400 = ssub.s32 512, 512
          %401 = vsyncadd %s386, %s400
          %s402 = smul.addr %s398, 2
          %s403 = smul.addr %s402, 128
          %s404 = scalar_lea.hbm %s4, %s403
          %s405 = sshll.u32 %s389, 4
          %s406 = int_to_ptr.vmem [resolvable:$true] %s405
          %411 = dma.vmem_to_hbm [thread:$0]  %s406, 512, %s404, %s386, 256, 256, 16
        $region48: #{tpu_custom_call.1} parent=35 // pred_fallthru
          _
        // Predicated region
        $region49: #{tpu_custom_call.1} parent=35 // pred_check
          %p412 = pneg %p167
        $region50: #{tpu_custom_call.1} parent=35 // pred_check_branch
          %414 = sbr.rel (%p412) target = $region52
        $region51: #{tpu_custom_call.1} parent=35 // pred_region
          %s415 = smul.u32 2, %s29
          %s417 = ssub.s32 512, 512
          %418 = vsyncadd %s391, %s417
          %s419 = smul.addr %s415, 2
          %s420 = smul.addr %s419, 128
          %s421 = scalar_lea.hbm %s5, %s420
          %s422 = sshll.u32 %s394, 4
          %s423 = int_to_ptr.vmem [resolvable:$true] %s422
          %428 = dma.vmem_to_hbm [thread:$0]  %s423, 512, %s421, %s391, 256, 256, 16
        $region52: #{tpu_custom_call.1} parent=35 // pred_fallthru
          _
      $region36: #{tpu_custom_call.1} parent=5 // pred_fallthru
        _
      %p429 = scmp.le.s32.totalorder 2, %s24
      // Predicated region
      $region53: #{tpu_custom_call.1} parent=5 // pred_check
        %p430 = pneg %p429
      $region54: #{tpu_custom_call.1} parent=5 // pred_check_branch
        %432 = sbr.rel (%p430) target = $region56
      $region55: #{tpu_custom_call.1} parent=5 // pred_region
        %s433 = ssub.s32 %s24, 2
        // Predicated region
        $region57: #{tpu_custom_call.1} parent=55 // pred_check
          %p434 = pneg %p147
        $region58: #{tpu_custom_call.1} parent=55 // pred_check_branch
          %436 = sbr.rel (%p434) target = $region60
        $region59: #{tpu_custom_call.1} parent=55 // pred_region
          %s437 = sand.u32 %s132, 1
          %s438 = scalar_lea.sflag [#allocation4], %s437
          %s439 = sand.u32 %s132, 1
          %s440 = smul.addr %s439, 32
          %s441 = scalar_lea.vmem [#allocation7], %s440
          %442 = dma.done %s438, 512
        $region60: #{tpu_custom_call.1} parent=55 // pred_fallthru
          _
        // Predicated region
        $region61: #{tpu_custom_call.1} parent=55 // pred_check
          %p443 = pneg %p173
        $region62: #{tpu_custom_call.1} parent=55 // pred_check_branch
          %445 = sbr.rel (%p443) target = $region64
        $region63: #{tpu_custom_call.1} parent=55 // pred_region
          %s446 = sand.u32 %s158, 1
          %s447 = scalar_lea.sflag [#allocation9], %s446
          %s448 = sand.u32 %s158, 1
          %s449 = smul.addr %s448, 32
          %s450 = scalar_lea.vmem [#allocation8], %s449
          %451 = dma.done %s447, 512
        $region64: #{tpu_custom_call.1} parent=55 // pred_fallthru
          _
      $region56: #{tpu_custom_call.1} parent=5 // pred_fallthru
        _
    $region6: #{tpu_custom_call.1} parent=1 // loop_footer
      %s28 = sadd.s32 1, %s24
    $region7: #{tpu_custom_call.1} parent=1 // loop_footer_branch
      %23 = sbr.rel target = $region3
    $region8: #{tpu_custom_call.1} parent=1 // loop_exit
      _
    %452 = vsyncpa [#allocation3], 1
    %s453 = scalar_lea.sflag [#allocation3], 1
    %454 = vsyncpa %s453, 1
    %455 = vsyncpa [#allocation6], 1
    %s456 = scalar_lea.sflag [#allocation6], 1
    %457 = vsyncpa %s456, 1
    %458 = vsyncpa [#allocation4], 1
    %s459 = scalar_lea.sflag [#allocation4], 1
    %460 = vsyncpa %s459, 1
    %461 = vsyncpa [#allocation9], 1
    %s462 = scalar_lea.sflag [#allocation9], 1
    %463 = vsyncpa %s462, 1

</llo_original>
